<compile_context>
chip_gen: v7x
topology: tpu7x:2x2x1
jax: 0.10.0
libtpu: 0.0.40
codegen_flags: <defaults>
</compile_context>

<pallas_src>
import math

import jax
import jax.numpy as jnp
from jax.experimental import pallas as pl
from jax.experimental.pallas import tpu as pltpu


def _affine_kernel(pos_ref, sty_ref, wp_ref, ws_ref, b_ref, out_ref):
    """out = pos @ W_pos + sty @ W_sty + b  (single fused affine map)."""
    acc = jnp.dot(pos_ref[...], wp_ref[...], preferred_element_type=jnp.float32)
    acc = acc + jnp.dot(sty_ref[...], ws_ref[...], preferred_element_type=jnp.float32)
    acc = acc + b_ref[...].astype(jnp.float32)
    out_ref[...] = acc.astype(out_ref.dtype)


def _fold_linear_chain(weights, biases):
    """Fold a chain of Linear layers (no activations) into one (W_eff, b_eff).

    weights[i]: (in_i, out_i)   biases[i]: (1, out_i)
    Equivalent because  ((x@W0 + b0)@W1 + b1) = x@(W0@W1) + (b0@W1 + b1), etc.
    """
    w_eff = weights[0]
    b_eff = biases[0]
    for w, b in zip(weights[1:], biases[1:]):
        w_eff = jnp.dot(w_eff, w, preferred_element_type=jnp.float32)
        b_eff = jnp.dot(b_eff, w, preferred_element_type=jnp.float32) + b
    return w_eff, b_eff


def positional_style_encoder(ray_positions, style, weights, biases, *, block_batch=None):
    """Pallas implementation of PositionalStyleEncoder.forward.

    ray_positions: (B, positional_features)
    style:         (B, style_features)
    weights:       list of (in_i, out_i) arrays (pre-transposed vs. PyTorch)
    biases:        list of (1, out_i) arrays
    """
    B, P = ray_positions.shape
    B_s, S = style.shape
    assert B == B_s, "ray_positions / style batch mismatch"
    out_dim = weights[-1].shape[1]
    out_dtype = ray_positions.dtype

    # --- Fold the all-Linear chain into one affine map (trace-time, tiny) ----
    w_eff, b_eff = _fold_linear_chain(weights, biases)       # (P+S, out), (1, out)
    w_pos = w_eff[:P, :]                                      # (P, out)
    w_sty = w_eff[P:, :]                                      # (S, out)

    # --- Choose batch tile: multiple of 8, big enough to pipeline -----------
    if block_batch is None:
        block_batch = 1024
    block_batch = min(block_batch, B)
    if block_batch < B:
        block_batch = max(8, (block_batch // 8) * 8)
    # If the tile does not cover B exactly, pad the batch (padding sliced off).
    num_tiles = pl.cdiv(B, block_batch)
    B_pad = num_tiles * block_batch
    if B_pad != B:
        pad = B_pad - B
        ray_positions = jnp.pad(ray_positions, ((0, pad), (0, 0)))
        style = jnp.pad(style, ((0, pad), (0, 0)))

    grid = (num_tiles,)

    in_specs = [
        pl.BlockSpec((block_batch, P), lambda i: (i, 0)),      # positional tile
        pl.BlockSpec((block_batch, S), lambda i: (i, 0)),      # style tile
        pl.BlockSpec(w_pos.shape, lambda i: (0, 0)),           # W_pos (resident)
        pl.BlockSpec(w_sty.shape, lambda i: (0, 0)),           # W_sty (resident)
        pl.BlockSpec(b_eff.shape, lambda i: (0, 0)),           # b_eff (resident)
    ]
    out_spec = pl.BlockSpec((block_batch, out_dim), lambda i: (i, 0))

    out = pl.pallas_call(
        _affine_kernel,
        out_shape=jax.ShapeDtypeStruct((B_pad, out_dim), out_dtype),
        grid=grid,
        in_specs=in_specs,
        out_specs=out_spec,
        compiler_params=pltpu.CompilerParams(
            dimension_semantics=("parallel",),
        ),
    )(ray_positions, style, w_pos, w_sty, b_eff)

    if B_pad != B:
        out = out[:B]
    return out


def init_params(key, positional_features, style_features, layers_width, layers_count):
    """Deterministic init mimicking torch.nn.Linear defaults (U(-1/sqrt(fan_in), ...))."""
    weights, biases = [], []
    in_dim = positional_features + style_features
    for _ in range(layers_count):
        key, kw, kb = jax.random.split(key, 3)
        bound = 1.0 / math.sqrt(in_dim)
        # stored as (in, out): transpose of PyTorch's (out, in)
        w = jax.random.uniform(kw, (in_dim, layers_width), jnp.float32, -bound, bound)
        b = jax.random.uniform(kb, (1, layers_width), jnp.float32, -bound, bound)
        weights.append(w)
        biases.append(b)
        in_dim = layers_width
    return weights, biases


def reference_forward(ray_positions, style, weights, biases):
    """Layer-by-layer reference (matches the PyTorch module's semantics)."""
    x = jnp.concatenate([ray_positions, style], axis=-1)
    for w, b in zip(weights, biases):
        x = x @ w + b
    return x


if __name__ == "__main__":
    positional_features = 16
    style_features = 16
    layers_width = 32
    layers_count = 3
    batch = 8

    key = jax.random.PRNGKey(0)
    key, k_pos, k_sty = jax.random.split(key, 3)
    ray_positions = jax.random.normal(k_pos, (batch, positional_features), jnp.float32)
    style = jax.random.normal(k_sty, (batch, style_features), jnp.float32)

    weights, biases = init_params(
        key, positional_features, style_features, layers_width, layers_count
    )

    out = positional_style_encoder(ray_positions, style, weights, biases)
    out = jax.block_until_ready(out)

    ref = reference_forward(ray_positions, style, weights, biases)
    assert out.shape == (batch, layers_width)
    # Layer folding reassociates f32 matmuls; tolerance covers that tiny drift.
    assert jnp.allclose(out, ref, atol=1e-4, rtol=1e-4), "mismatch vs. JAX reference"

    print("KERNEL_OK")
</pallas_src>

<mosaic_0001>
module attributes {stable_mosaic.version = 11 : i64} {
  func.func @_affine_kernel(%arg0: i32, %arg1: memref<8x16xf32, #tpu.memory_space<vmem>>, %arg2: memref<8x16xf32, #tpu.memory_space<vmem>>, %arg3: memref<16x32xf32, #tpu.memory_space<vmem>>, %arg4: memref<16x32xf32, #tpu.memory_space<vmem>>, %arg5: memref<1x32xf32, #tpu.memory_space<vmem>>, %arg6: memref<8x32xf32, #tpu.memory_space<vmem>>) attributes {dimension_semantics = [#tpu.dimension_semantics<parallel>], iteration_bounds = array<i64: 1>, scalar_prefetch = 0 : i64, scratch_operands = 0 : i64, tpu.core_type = #tpu.core_type<tc>, window_params = [{transform_indices = @transform_0, window_bounds = array<i64: 8, 16>}, {transform_indices = @transform_1, window_bounds = array<i64: 8, 16>}, {pipeline_mode = #tpu.pipeline_mode<synchronous>, transform_indices = @transform_2, window_bounds = array<i64: 16, 32>}, {pipeline_mode = #tpu.pipeline_mode<synchronous>, transform_indices = @transform_3, window_bounds = array<i64: 16, 32>}, {pipeline_mode = #tpu.pipeline_mode<synchronous>, transform_indices = @transform_4, window_bounds = array<i64: 1, 32>}, {transform_indices = @transform_5, window_bounds = array<i64: 8, 32>}]} {
    %c0 = arith.constant 0 : index
    %c0_0 = arith.constant 0 : index
    %0 = vector.load %arg1[%c0, %c0_0] : memref<8x16xf32, #tpu.memory_space<vmem>>, vector<8x16xf32>
    %c0_1 = arith.constant 0 : index
    %c0_2 = arith.constant 0 : index
    %1 = vector.load %arg3[%c0_1, %c0_2] : memref<16x32xf32, #tpu.memory_space<vmem>>, vector<16x32xf32>
    %cst = arith.constant dense<0.000000e+00> : vector<8x32xf32>
    %2 = tpu.matmul %0, %1, %cst {dimension_numbers = #tpu.dot_dimension_numbers<[1], [0], [0], [1], [0, 0, 1, 1], [], []>} : vector<8x16xf32>, vector<16x32xf32>, vector<8x32xf32> -> vector<8x32xf32>
    %c0_3 = arith.constant 0 : index
    %c0_4 = arith.constant 0 : index
    %3 = vector.load %arg2[%c0_3, %c0_4] : memref<8x16xf32, #tpu.memory_space<vmem>>, vector<8x16xf32>
    %c0_5 = arith.constant 0 : index
    %c0_6 = arith.constant 0 : index
    %4 = vector.load %arg4[%c0_5, %c0_6] : memref<16x32xf32, #tpu.memory_space<vmem>>, vector<16x32xf32>
    %cst_7 = arith.constant dense<0.000000e+00> : vector<8x32xf32>
    %5 = tpu.matmul %3, %4, %cst_7 {dimension_numbers = #tpu.dot_dimension_numbers<[1], [0], [0], [1], [0, 0, 1, 1], [], []>} : vector<8x16xf32>, vector<16x32xf32>, vector<8x32xf32> -> vector<8x32xf32>
    %6 = arith.addf %2, %5 : vector<8x32xf32>
    %c0_8 = arith.constant 0 : index
    %c0_9 = arith.constant 0 : index
    %7 = vector.load %arg5[%c0_8, %c0_9] : memref<1x32xf32, #tpu.memory_space<vmem>>, vector<1x32xf32>
    %8 = vector.broadcast %7 : vector<1x32xf32> to vector<8x32xf32>
    %9 = arith.addf %6, %8 : vector<8x32xf32>
    %c0_10 = arith.constant 0 : index
    %c0_11 = arith.constant 0 : index
    %10 = vector.load %arg6[%c0_10, %c0_11] : memref<8x32xf32, #tpu.memory_space<vmem>>, vector<8x32xf32>
    tpu.vector_store %arg6[%c0_10, %c0_11], %9 {strides = array<i32>} : memref<8x32xf32, #tpu.memory_space<vmem>>, vector<8x32xf32>,
    return
  }
  func.func @transform_0(%arg0: i32) -> (i32, i32) {
    %c0_i32 = arith.constant 0 : i32
    %c0_i32_0 = arith.constant 0 : i32
    return %arg0, %c0_i32 : i32, i32
  }
  func.func @transform_1(%arg0: i32) -> (i32, i32) {
    %c0_i32 = arith.constant 0 : i32
    %c0_i32_0 = arith.constant 0 : i32
    return %arg0, %c0_i32 : i32, i32
  }
  func.func @transform_2(%arg0: i32) -> (i32, i32) {
    %c0_i32 = arith.constant 0 : i32
    %c0_i32_0 = arith.constant 0 : i32
    %c0_i32_1 = arith.constant 0 : i32
    return %c0_i32, %c0_i32_0 : i32, i32
  }
  func.func @transform_3(%arg0: i32) -> (i32, i32) {
    %c0_i32 = arith.constant 0 : i32
    %c0_i32_0 = arith.constant 0 : i32
    %c0_i32_1 = arith.constant 0 : i32
    return %c0_i32, %c0_i32_0 : i32, i32
  }
  func.func @transform_4(%arg0: i32) -> (i32, i32) {
    %c0_i32 = arith.constant 0 : i32
    %c0_i32_0 = arith.constant 0 : i32
    %c0_i32_1 = arith.constant 0 : i32
    return %c0_i32, %c0_i32_0 : i32, i32
  }
  func.func @transform_5(%arg0: i32) -> (i32, i32) {
    %c0_i32 = arith.constant 0 : i32
    %c0_i32_0 = arith.constant 0 : i32
    return %arg0, %c0_i32 : i32, i32
  }
}

</mosaic_0001>

<llo_original>
// kernel: tpu_custom_call.1
$region0: #{tpu_custom_call.1}
  #allocation0 [shape = 'u32[]', space=smem, size = 0x4, offset = 0x4, fixed_abs, tag = 'smem constant byte address 0x4 - core index']
  #allocation1 [shape = 'u32[144,128]{1,0:T(1,128)}', space=vmem, size = 0x12000, scoped, tag = 'internal scratch']
  %s0 = inlined_call_operand.hbm [shape: f32[8,16], index: 0, kind: input, shape index: {}]
  %s1 = inlined_call_operand.hbm [shape: f32[8,16], index: 1, kind: input, shape index: {}]
  %s2 = inlined_call_operand.hbm [shape: f32[16,32], index: 2, kind: input, shape index: {}]
  %s3 = inlined_call_operand.hbm [shape: f32[16,32], index: 3, kind: input, shape index: {}]
  %s4 = inlined_call_operand.vmem [shape: f32[1,32], index: 4, kind: input, shape index: {}]
  %s5 = inlined_call_operand.hbm [shape: f32[8,32], index: 5, kind: output, shape index: {}]
  %s6 = sld [smem:[#allocation0]]
  $region46: #{tpu_custom_call.1} parent=0
    _
  %s8 = ssub.s32 1, %s6
  %s9 = scalar_select 0, %s8, %s6
  $region1: #{tpu_custom_call.1} parent=0
    #allocation2 [shape = 'u8[4096]{0}', space=vmem, size = 0x1000, scoped, tag = 'input window, operand 0, single buffered']
    #allocation3 [shape = 's32[1]{0}', space=sflag, size = 0x4, scoped, tag = 'scoped memory for tpu_custom_call.1']
    #allocation4 [shape = 's32[1]{0}', space=sflag, size = 0x4, scoped, tag = 'scoped memory for tpu_custom_call.1']
    #allocation5 [shape = 'u8[4096]{0}', space=vmem, size = 0x1000, scoped, tag = 'input window, operand 1, single buffered']
    #allocation6 [shape = 's32[1]{0}', space=sflag, size = 0x4, scoped, tag = 'scoped memory for tpu_custom_call.1']
    #allocation7 [shape = 'u8[8192]{0}', space=vmem, size = 0x2000, scoped, tag = 'input window, operand 2, single buffered']
    #allocation8 [shape = 'u8[8192]{0}', space=vmem, size = 0x2000, scoped, tag = 'input window, operand 3, single buffered']
    #allocation9 [shape = 's32[1]{0}', space=sflag, size = 0x4, scoped, tag = 'scoped memory for tpu_custom_call.1']
    #allocation10 [shape = 'u8[4096]{0}', space=vmem, size = 0x1000, scoped, tag = 'output window, operand 0, single buffered']
    %10 = vsyncpa [#allocation3], 0
    %11 = vsyncpa [#allocation6], 0
    %12 = vsyncpa [#allocation9], 0
    %13 = vsyncpa [#allocation4], 0
    // Predicated region
    $region2: #{tpu_custom_call.1} parent=1 // pred_check
      _
    $region3: #{tpu_custom_call.1} parent=1 // pred_check_branch
      %15 = sbr.rel (0) target = $region5
    $region4: #{tpu_custom_call.1} parent=1 // pred_region
      %s17 = ssub.s32 128, 128
      %18 = vsyncadd [#allocation3], %s17
      %s20 = sshll.u32 [#allocation2], 4
      %s21 = int_to_ptr.vmem [resolvable:$true] %s20
      %23 = dma.hbm_to_vmem [thread:$0]  %s0, 128, %s21, [#allocation3]
    $region5: #{tpu_custom_call.1} parent=1 // pred_fallthru
      _
    // Predicated region
    $region6: #{tpu_custom_call.1} parent=1 // pred_check
      _
    $region7: #{tpu_custom_call.1} parent=1 // pred_check_branch
      %25 = sbr.rel (0) target = $region9
    $region8: #{tpu_custom_call.1} parent=1 // pred_region
      %s27 = ssub.s32 128, 128
      %28 = vsyncadd [#allocation6], %s27
      %s30 = sshll.u32 [#allocation5], 4
      %s31 = int_to_ptr.vmem [resolvable:$true] %s30
      %33 = dma.hbm_to_vmem [thread:$0]  %s1, 128, %s31, [#allocation6]
    $region9: #{tpu_custom_call.1} parent=1 // pred_fallthru
      _
    // Predicated region
    $region10: #{tpu_custom_call.1} parent=1 // pred_check
      _
    $region11: #{tpu_custom_call.1} parent=1 // pred_check_branch
      %35 = sbr.rel (0) target = $region13
    $region12: #{tpu_custom_call.1} parent=1 // pred_region
      %s37 = ssub.s32 256, 256
      %38 = vsyncadd [#allocation6], %s37
      %s39 = sshll.u32 [#allocation7], 4
      %s40 = int_to_ptr.vmem [resolvable:$true] %s39
      %45 = dma.hbm_to_vmem [thread:$0]  %s2, 256, %s40, [#allocation6], 128, 128, 8
    $region13: #{tpu_custom_call.1} parent=1 // pred_fallthru
      _
    // Predicated region
    $region14: #{tpu_custom_call.1} parent=1 // pred_check
      _
    $region15: #{tpu_custom_call.1} parent=1 // pred_check_branch
      %47 = sbr.rel (0) target = $region17
    $region16: #{tpu_custom_call.1} parent=1 // pred_region
      %s49 = ssub.s32 256, 256
      %50 = vsyncadd [#allocation9], %s49
      %s51 = sshll.u32 [#allocation8], 4
      %s52 = int_to_ptr.vmem [resolvable:$true] %s51
      %57 = dma.hbm_to_vmem [thread:$0]  %s3, 256, %s52, [#allocation9], 128, 128, 8
    $region17: #{tpu_custom_call.1} parent=1 // pred_fallthru
      _
    // Predicated region
    $region18: #{tpu_custom_call.1} parent=1 // pred_check
      _
    $region19: #{tpu_custom_call.1} parent=1 // pred_check_branch
      %59 = sbr.rel (0) target = $region21
    $region20: #{tpu_custom_call.1} parent=1 // pred_region
      _
    $region21: #{tpu_custom_call.1} parent=1 // pred_fallthru
      _
    // Predicated region
    $region22: #{tpu_custom_call.1} parent=1 // pred_check
      _
    $region23: #{tpu_custom_call.1} parent=1 // pred_check_branch
      %61 = sbr.rel (0) target = $region25
    $region24: #{tpu_custom_call.1} parent=1 // pred_region
      %62 = dma.done [#allocation3], 128
    $region25: #{tpu_custom_call.1} parent=1 // pred_fallthru
      _
    // Predicated region
    $region26: #{tpu_custom_call.1} parent=1 // pred_check
      _
    $region27: #{tpu_custom_call.1} parent=1 // pred_check_branch
      %64 = sbr.rel (0) target = $region29
    $region28: #{tpu_custom_call.1} parent=1 // pred_region
      %65 = dma.done [#allocation6], 128
    $region29: #{tpu_custom_call.1} parent=1 // pred_fallthru
      _
    // Predicated region
    $region30: #{tpu_custom_call.1} parent=1 // pred_check
      _
    $region31: #{tpu_custom_call.1} parent=1 // pred_check_branch
      %67 = sbr.rel (0) target = $region33
    $region32: #{tpu_custom_call.1} parent=1 // pred_region
      %68 = dma.done [#allocation6], 256
    $region33: #{tpu_custom_call.1} parent=1 // pred_fallthru
      _
    // Predicated region
    $region34: #{tpu_custom_call.1} parent=1 // pred_check
      _
    $region35: #{tpu_custom_call.1} parent=1 // pred_check_branch
      %70 = sbr.rel (0) target = $region37
    $region36: #{tpu_custom_call.1} parent=1 // pred_region
      %71 = dma.done [#allocation9], 256
    $region37: #{tpu_custom_call.1} parent=1 // pred_fallthru
      _
    %v72 = vld [vmem:[#allocation2] sm:$0xff]
    %v73 = vld [vmem:[#allocation7] sm:$0xff]
    %v74 = vld [vmem:[#allocation7 + $0x8] sm:$0xff]
    %v75 = vld [vmem:[#allocation5] sm:$0xff]
    %v76 = vld [vmem:[#allocation8] sm:$0xff]
    %v77 = vld [vmem:[#allocation8 + $0x8] sm:$0xff]
    %vm78 = vcmask 130048
    %v80 = vsel %vm78, %v75, 0
    %82 = vmatprep.subr.mxu0 0.0
    %83 = vmatpush1.msra.mxu0 %v76
    %84 = vmatprep.subr.mxu0 0.0
    %85 = vmatpush1.msra.mxu0 %v77
    %86 = vmatprep.subr.mxu0 0.0
    %87 = vmatpush1.msra.mxu0 0.0
    %88 = vmatprep.subr.mxu0 0.0
    %89 = vmatpush1.msra.mxu0 0.0
    %90 = vmatprep.subr.mxu0 0.0
    %91 = vmatpush1.msra.mxu0 0.0
    %92 = vmatprep.subr.mxu0 0.0
    %93 = vmatpush1.msra.mxu0 0.0
    %94 = vmatprep.subr.mxu0 0.0
    %95 = vmatpush1.msra.mxu0 0.0
    %96 = vmatprep.subr.mxu0 0.0
    %97 = vmatpush1.msra.mxu0 0.0
    %98 = vmatprep.subr.mxu0 0.0
    %99 = vmatpush1.msra.mxu0 0.0
    %100 = vmatprep.subr.mxu0 0.0
    %101 = vmatpush1.msra.mxu0 0.0
    %102 = vmatprep.subr.mxu0 0.0
    %103 = vmatpush1.msra.mxu0 0.0
    %104 = vmatprep.subr.mxu0 0.0
    %105 = vmatpush1.msra.mxu0 0.0
    %106 = vmatprep.subr.mxu0 0.0
    %107 = vmatpush1.msra.mxu0 0.0
    %108 = vmatprep.subr.mxu0 0.0
    %109 = vmatpush1.msra.mxu0 0.0
    %110 = vmatprep.subr.mxu0 0.0
    %111 = vmatpush1.msra.mxu0 0.0
    %112 = vmatprep.subr.mxu0 0.0
    %113 = vmatpush1.msra.mxu0 0.0
    %114 = vmatprep.subr.mxu0 0.0
    %115 = vmatpush1.msra.mxu0 0.0
    %116 = vmatprep.subr.mxu0 0.0
    %117 = vmatpush1.msra.mxu0 0.0
    %118 = vmatprep.subr.mxu0 0.0
    %119 = vmatpush1.msra.mxu0 0.0
    %120 = vmatprep.subr.mxu0 0.0
    %121 = vmatpush1.msra.mxu0 0.0
    %122 = vmatprep.subr.mxu0 0.0
    %123 = vmatpush1.msra.mxu0 0.0
    %124 = vmatprep.subr.mxu0 0.0
    %125 = vmatpush1.msra.mxu0 0.0
    %126 = vmatprep.subr.mxu0 0.0
    %127 = vmatpush1.msra.mxu0 0.0
    %128 = vmatprep.subr.mxu0 0.0
    %129 = vmatpush1.msra.mxu0 0.0
    %130 = vmatprep.subr.mxu0 0.0
    %131 = vmatpush1.msra.mxu0 0.0
    %132 = vmatprep.subr.mxu0 0.0
    %133 = vmatpush1.msra.mxu0 0.0
    %134 = vmatprep.subr.mxu0 0.0
    %135 = vmatpush1.msra.mxu0 0.0
    %136 = vmatprep.subr.mxu0 0.0
    %137 = vmatpush1.msra.mxu0 0.0
    %138 = vmatprep.subr.mxu0 0.0
    %139 = vmatpush1.msra.mxu0 0.0
    %140 = vmatprep.subr.mxu0 0.0
    %141 = vmatpush1.msra.mxu0 0.0
    %142 = vmatprep.subr.mxu0 0.0
    %143 = vmatpush1.msra.mxu0 0.0
    %144 = vmatprep.subr.mxu0 0.0
    %145 = vmatpush1.msra.mxu0 0.0
    %146 = vmatprep.mubr.f32.mxu0 0.0
    %147 = vmatmul.mubr.f32.gmra.mrb[0].mxu0 %v80
    %v148 = vpop.f32.mrb[0].mxu0
    %v149 = vadd.f32 0.0, %v148
    %v150 = vpop.f32.mrb[0].mxu0
    %151 = vdwg.mxu0
    %v153 = vsel %vm78, %v72, 0
    %155 = vmatprep.subr.mxu0 0.0
    %156 = vmatpush1.msra.mxu0 %v73
    %157 = vmatprep.subr.mxu0 0.0
    %158 = vmatpush1.msra.mxu0 %v74
    %159 = vmatprep.subr.mxu0 0.0
    %160 = vmatpush1.msra.mxu0 0.0
    %161 = vmatprep.subr.mxu0 0.0
    %162 = vmatpush1.msra.mxu0 0.0
    %163 = vmatprep.subr.mxu0 0.0
    %164 = vmatpush1.msra.mxu0 0.0
    %165 = vmatprep.subr.mxu0 0.0
    %166 = vmatpush1.msra.mxu0 0.0
    %167 = vmatprep.subr.mxu0 0.0
    %168 = vmatpush1.msra.mxu0 0.0
    %169 = vmatprep.subr.mxu0 0.0
    %170 = vmatpush1.msra.mxu0 0.0
    %171 = vmatprep.subr.mxu0 0.0
    %172 = vmatpush1.msra.mxu0 0.0
    %173 = vmatprep.subr.mxu0 0.0
    %174 = vmatpush1.msra.mxu0 0.0
    %175 = vmatprep.subr.mxu0 0.0
    %176 = vmatpush1.msra.mxu0 0.0
    %177 = vmatprep.subr.mxu0 0.0
    %178 = vmatpush1.msra.mxu0 0.0
    %179 = vmatprep.subr.mxu0 0.0
    %180 = vmatpush1.msra.mxu0 0.0
    %181 = vmatprep.subr.mxu0 0.0
    %182 = vmatpush1.msra.mxu0 0.0
    %183 = vmatprep.subr.mxu0 0.0
    %184 = vmatpush1.msra.mxu0 0.0
    %185 = vmatprep.subr.mxu0 0.0
    %186 = vmatpush1.msra.mxu0 0.0
    %187 = vmatprep.subr.mxu0 0.0
    %188 = vmatpush1.msra.mxu0 0.0
    %189 = vmatprep.subr.mxu0 0.0
    %190 = vmatpush1.msra.mxu0 0.0
    %191 = vmatprep.subr.mxu0 0.0
    %192 = vmatpush1.msra.mxu0 0.0
    %193 = vmatprep.subr.mxu0 0.0
    %194 = vmatpush1.msra.mxu0 0.0
    %195 = vmatprep.subr.mxu0 0.0
    %196 = vmatpush1.msra.mxu0 0.0
    %197 = vmatprep.subr.mxu0 0.0
    %198 = vmatpush1.msra.mxu0 0.0
    %199 = vmatprep.subr.mxu0 0.0
    %200 = vmatpush1.msra.mxu0 0.0
    %201 = vmatprep.subr.mxu0 0.0
    %202 = vmatpush1.msra.mxu0 0.0
    %203 = vmatprep.subr.mxu0 0.0
    %204 = vmatpush1.msra.mxu0 0.0
    %205 = vmatprep.subr.mxu0 0.0
    %206 = vmatpush1.msra.mxu0 0.0
    %207 = vmatprep.subr.mxu0 0.0
    %208 = vmatpush1.msra.mxu0 0.0
    %209 = vmatprep.subr.mxu0 0.0
    %210 = vmatpush1.msra.mxu0 0.0
    %211 = vmatprep.subr.mxu0 0.0
    %212 = vmatpush1.msra.mxu0 0.0
    %213 = vmatprep.subr.mxu0 0.0
    %214 = vmatpush1.msra.mxu0 0.0
    %215 = vmatprep.subr.mxu0 0.0
    %216 = vmatpush1.msra.mxu0 0.0
    %217 = vmatprep.subr.mxu0 0.0
    %218 = vmatpush1.msra.mxu0 0.0
    %219 = vmatprep.mubr.f32.mxu0 0.0
    %220 = vmatmul.mubr.f32.gmra.mrb[0].mxu0 %v153
    %v221 = vpop.f32.mrb[0].mxu0
    %v222 = vadd.f32 %v149, %v221
    %v223 = vpop.f32.mrb[0].mxu0
    %224 = vdwg.mxu0
    %v225 = vld [vmem:[%s4] sm:$0x1]
    %v227 = vlaneseq
    %v228 = vshrl.u32 %v227, 7
    %v229 = vsub.s32 0, %v228
    %v230 = vrot.slane %v225, %v229
    %v232 = vadd.f32 %v222, %v230
    %vm233 = vcmask 261120
    %234 = vst.msk [vmem:[#allocation10] sm:$0xff] %vm233, %v232
    // Predicated region
    $region38: #{tpu_custom_call.1} parent=1 // pred_check
      _
    $region39: #{tpu_custom_call.1} parent=1 // pred_check_branch
      %236 = sbr.rel (0) target = $region41
    $region40: #{tpu_custom_call.1} parent=1 // pred_region
      %s238 = ssub.s32 128, 128
      %239 = vsyncadd [#allocation4], %s238
      %s241 = sshll.u32 [#allocation10], 4
      %s242 = int_to_ptr.vmem [resolvable:$true] %s241
      %244 = dma.vmem_to_hbm [thread:$0]  %s242, 128, %s5, [#allocation4]
    $region41: #{tpu_custom_call.1} parent=1 // pred_fallthru
      _
    // Predicated region
    $region42: #{tpu_custom_call.1} parent=1 // pred_check
      _
    $region43: #{tpu_custom_call.1} parent=1 // pred_check_branch
      %246 = sbr.rel (0) target = $region45
    $region44: #{tpu_custom_call.1} parent=1 // pred_region
      %247 = dma.done [#allocation4], 128
    $region45: #{tpu_custom_call.1} parent=1 // pred_fallthru
      _
    %248 = vsyncpa [#allocation3], 1
    %249 = vsyncpa [#allocation6], 1
    %250 = vsyncpa [#allocation9], 1
    %251 = vsyncpa [#allocation4], 1

</llo_original>
